<compile_context>
chip_gen: v7x
topology: tpu7x:2x2x1
jax: 0.10.0
libtpu: 0.0.40
codegen_flags: <defaults>
</compile_context>

<pallas_src>
import functools

import jax
import jax.numpy as jnp
from jax.experimental import pallas as pl
from jax.experimental.pallas import tpu as pltpu


# ----------------------------- Pallas kernel ---------------------------------
def spt_kernel(x_ref, g_ref, beta_ref, w_ref, b_ref, o_ref, *, eps):
    # x_ref:   (TILE, F)     f32   flattened patches (true feature width)
    # g_ref:   (1, F)        f32   LayerNorm gamma
    # beta_ref:(1, F)        f32   LayerNorm beta
    # w_ref:   (F, E_PAD)    bf16  projection weight (zero cols beyond E)
    # b_ref:   (1, E_PAD)    f32   projection bias   (zero beyond E)
    # o_ref:   (TILE, E_PAD) f32   lane-dense output
    x = x_ref[...]                                          # f32 stats (exact F)
    mean = jnp.mean(x, axis=-1, keepdims=True)
    xc = x - mean
    var = jnp.mean(xc * xc, axis=-1, keepdims=True)         # two-pass variance
    inv_std = jax.lax.rsqrt(var + eps)
    h = xc * inv_std * g_ref[...] + beta_ref[...]
    o_ref[...] = (
        jnp.dot(h.astype(jnp.bfloat16), w_ref[...],
                preferred_element_type=jnp.float32)
        + b_ref[...]
    )


def _round_up(x, m):
    return ((x + m - 1) // m) * m


def _vmem_budget_bytes():
    """Pick a scoped-VMEM budget per chip generation."""
    cap = 64 << 20
    try:
        cap = int(getattr(pltpu.get_tpu_info(), "vmem_capacity_bytes", cap))
    except Exception:
        pass
    if cap >= (100 << 20):          # v5e / v6e: 128 MiB physical VMEM
        return 64 << 20
    return min(40 << 20, (cap * 5) // 8)   # v7x-class: 64 MiB physical


def _pick_tile_rows(n, f, e_pad, vmem_budget):
    """Largest row tile that fits the budget; >=2 grid steps when possible."""
    # Resident params (W is the big one); count their default double buffer.
    fixed = 2 * (f * e_pad * 2) + 2 * (2 * f + e_pad) * 4
    # Per row: x double-buffered f32 + in-kernel f32/bf16 temporaries (~4x F f32)
    # + double-buffered f32 output block.
    per_row = (2 * f) * 4 + (4 * f) * 4 + (2 * e_pad) * 4
    tile = max(16, min(1024, (vmem_budget - fixed) // per_row))
    tile = (tile // 16) * 16                       # bf16 sublane packing
    tile = min(tile, _round_up(n, 16))             # never bigger than needed
    if n > 16 and tile >= n:
        # Guarantee >=2 grid steps so ("parallel",) splits across TensorCores.
        tile = _round_up(pl.cdiv(n, 2), 16)
    return max(16, tile)


def spt_ln_proj(x, gamma, beta, w_p, b_p, *, embed_dim, eps):
    """Fused LayerNorm + Linear on (N, F) rows via a row-gridded Pallas call."""
    n, f = x.shape
    e_pad = w_p.shape[1]
    budget = _vmem_budget_bytes()
    tile = _pick_tile_rows(n, f, e_pad, budget)
    grid = (pl.cdiv(n, tile),)                     # remainder tile handled by Pallas

    kernel = functools.partial(spt_kernel, eps=float(eps))
    out = pl.pallas_call(
        kernel,
        out_shape=jax.ShapeDtypeStruct((n, e_pad), jnp.float32),
        grid=grid,
        in_specs=[
            pl.BlockSpec((tile, f), lambda i: (i, 0)),     # patch rows (F = full dim)
            pl.BlockSpec((1, f), lambda i: (0, 0)),        # gamma (resident)
            pl.BlockSpec((1, f), lambda i: (0, 0)),        # beta  (resident)
            pl.BlockSpec((f, e_pad), lambda i: (0, 0)),    # W     (resident)
            pl.BlockSpec((1, e_pad), lambda i: (0, 0)),    # bias  (resident)
        ],
        out_specs=pl.BlockSpec((tile, e_pad), lambda i: (i, 0)),
        compiler_params=pltpu.CompilerParams(
            dimension_semantics=("parallel",),
            vmem_limit_bytes=budget,
        ),
    )(x.astype(jnp.float32), gamma, beta, w_p, b_p)
    if e_pad != embed_dim:
        out = out[:, :embed_dim]
    return out


# ------------------------------- JAX glue -------------------------------------
def prepare_spt_params(gamma, beta, w, b):
    """One-time param prep: lane-dense padded projection weight/bias (hoisted)."""
    f, e = w.shape
    e_pad = max(128, _round_up(e, 128))
    g_p = gamma.astype(jnp.float32).reshape(1, f)
    bt_p = beta.astype(jnp.float32).reshape(1, f)
    w_p = jnp.zeros((f, e_pad), jnp.bfloat16).at[:, :e].set(w.astype(jnp.bfloat16))
    b_p = jnp.zeros((1, e_pad), jnp.float32).at[0, :e].set(b.astype(jnp.float32))
    return (g_p, bt_p, w_p, b_p)


def shifted_concat(images, patch_size):
    """[x, left-up, left-down, right-up, right-down] along channels (B,5C,H,W)."""
    half = patch_size // 2
    B, C, H, W = images.shape              # module assumes square image
    th, tw = H - half, W - half
    # One pass over the image gives a per-pixel min across (B, C); each crop's
    # scalar fill (torch `crop.min()`) is then a tiny reduction over (H, W).
    pixmin = jnp.min(images, axis=(0, 1))

    def crop_shift_pad(ch, cw, sh, sw):
        crop = images[:, :, ch:ch + th, cw:cw + tw]
        fill = jnp.min(pixmin[ch:ch + th, cw:cw + tw])
        out = jnp.full((B, C, H, W), fill, images.dtype)
        return out.at[:, :, sh:sh + th, sw:sw + tw].set(crop)

    return jnp.concatenate(
        [images,
         crop_shift_pad(half, half, 0, 0),     # left-up
         crop_shift_pad(0, half, half, 0),     # left-down
         crop_shift_pad(half, 0, 0, half),     # right-up
         crop_shift_pad(0, 0, half, half)],    # right-down
        axis=1)


def extract_patches(x, window, stride, padding):
    """kornia.extract_tensor_patches + flatten: (B,C,H,W) -> (B, L, C*ws*ws)."""
    B, C, H, W = x.shape
    Hp, Wp = H + 2 * padding, W + 2 * padding
    nH = (Hp - window) // stride + 1
    nW = (Wp - window) // stride + 1
    if stride == window and Hp == nH * window and Wp == nW * window:
        # Pure pad + reshape + transpose (no gathers).
        xp = jnp.pad(x, ((0, 0), (0, 0), (padding, padding), (padding, padding)))
        g = xp.reshape(B, C, nH, window, nW, window)
        g = jnp.transpose(g, (0, 2, 4, 1, 3, 5))           # (B,nH,nW,C,ws,ws)
        return g.reshape(B, nH * nW, C * window * window)
    # General stride: one-hot depthwise-conv patch extraction.
    # Output channel ordering is (C, kh, kw), matching kornia's flatten.
    p = jax.lax.conv_general_dilated_patches(
        x, (window, window), (stride, stride),
        padding=((padding, padding), (padding, padding)),
        dimension_numbers=("NCHW", "OIHW", "NCHW"))        # (B, C*ws*ws, nH, nW)
    return jnp.transpose(p, (0, 2, 3, 1)).reshape(B, nH * nW, C * window * window)


@functools.partial(jax.jit,
                   static_argnames=("patch_size", "stride", "embed_dim", "eps"))
def shifted_patch_tokenization(padded_params, images, patch_size, stride,
                               embed_dim, eps=1e-6):
    """forward() of ShiftedPatchTokenization with vanilla=False."""
    g_p, bt_p, w_p, b_p = padded_params
    B = images.shape[0]
    imgs5 = shifted_concat(images, patch_size)                          # (B,5C,H,W)
    flat = extract_patches(imgs5, patch_size, stride, patch_size // 2)  # (B,L,F)
    _, L, F = flat.shape
    tokens = spt_ln_proj(flat.reshape(B * L, F), g_p, bt_p, w_p, b_p,
                         embed_dim=embed_dim, eps=eps)
    return tokens.reshape(B, L, embed_dim)


# ------------------------- independent reference ------------------------------
def _ref_shifted_concat(images, patch_size):
    half = patch_size // 2
    B, C, H, W = images.shape
    tgt = H - half

    def crop_shift_pad(mode):
        if mode == "left-up":
            ch, cw, sh, sw = half, half, 0, 0
        elif mode == "left-down":
            ch, cw, sh, sw = 0, half, half, 0
        elif mode == "right-up":
            ch, cw, sh, sw = half, 0, 0, half
        else:
            ch, cw, sh, sw = 0, 0, half, half
        crop = images[:, :, ch:ch + tgt, cw:cw + tgt]
        fill = jnp.min(crop)                      # pad_to_bounding_box fill value
        out = jnp.full((B, C, H, W), fill, images.dtype)
        return out.at[:, :, sh:sh + tgt, sw:sw + tgt].set(crop)

    return jnp.concatenate(
        [images, crop_shift_pad("left-up"), crop_shift_pad("left-down"),
         crop_shift_pad("right-up"), crop_shift_pad("right-down")], axis=1)


def _ref_extract_patches(x, window, stride, padding):
    """Gather-based extraction (independent of the pad+reshape fast path)."""
    B, C, H, W = x.shape
    xp = jnp.pad(x, ((0, 0), (0, 0), (padding, padding), (padding, padding)))
    Hp, Wp = H + 2 * padding, W + 2 * padding
    nH = (Hp - window) // stride + 1
    nW = (Wp - window) // stride + 1
    row_idx = (jnp.arange(nH)[:, None] * stride
               + jnp.arange(window)[None, :]).reshape(-1)
    col_idx = (jnp.arange(nW)[:, None] * stride
               + jnp.arange(window)[None, :]).reshape(-1)
    g = xp[:, :, row_idx, :]
    g = g[:, :, :, col_idx]
    g = g.reshape(B, C, nH, window, nW, window)
    g = jnp.transpose(g, (0, 2, 4, 1, 3, 5))
    return g.reshape(B, nH * nW, C * window * window)


def reference_forward(images, gamma, beta, w, b, patch_size, stride, eps=1e-6):
    """Pure-JAX f32 reference (mirrors the PyTorch module, independent glue)."""
    imgs5 = _ref_shifted_concat(images, patch_size)
    flat = _ref_extract_patches(imgs5, patch_size, stride, patch_size // 2)
    mu = jnp.mean(flat, axis=-1, keepdims=True)
    var = jnp.mean((flat - mu) ** 2, axis=-1, keepdims=True)
    xhat = (flat - mu) / jnp.sqrt(var + eps)
    return (xhat * gamma + beta) @ w + b


# --------------------------------- main ----------------------------------------
if __name__ == "__main__":
    B, C, IMG = 2, 4, 16
    PATCH, STRIDE, EMBED = 4, 4, 32
    F_DIM = 5 * PATCH * PATCH * C          # flattened_dim = 5*p*p*in_chans = 320

    root = jax.random.PRNGKey(0)
    k_img, k_w, k_b, k_g, k_bt = jax.random.split(root, 5)

    images = jax.random.normal(k_img, (B, C, IMG, IMG), jnp.float32)
    # nn.Linear(flattened_dim, embed_dim): trunc_normal(std=0.02)-like weight.
    w = jax.random.normal(k_w, (F_DIM, EMBED), jnp.float32) * 0.02
    b = jax.random.normal(k_b, (EMBED,), jnp.float32) * 0.01
    # LayerNorm affine (small perturbation so the affine path is exercised).
    gamma = 1.0 + 0.1 * jax.random.normal(k_g, (F_DIM,), jnp.float32)
    beta = 0.01 * jax.random.normal(k_bt, (F_DIM,), jnp.float32)

    padded_params = prepare_spt_params(gamma, beta, w, b)   # hoisted, once at init

    tokens = shifted_patch_tokenization(padded_params, images, PATCH, STRIDE, EMBED)
    jax.block_until_ready(tokens)

    ref = reference_forward(images, gamma, beta, w, b, PATCH, STRIDE)
    n_patches = (IMG // PATCH + 1) ** 2    # padded-by-half-patch extraction -> 25
    assert tokens.shape == (B, n_patches, EMBED), tokens.shape
    assert tokens.shape == ref.shape
    assert tokens.dtype == jnp.float32
    err = float(jnp.max(jnp.abs(tokens - ref)))
    assert err < 2e-2, f"max abs err {err}"

    print("KERNEL_OK")
</pallas_src>

<mosaic_0001>
module attributes {stable_mosaic.version = 11 : i64} {
  func.func @spt_kernel(%arg0: i32, %arg1: memref<32x320xf32, #tpu.memory_space<vmem>>, %arg2: memref<1x320xf32, #tpu.memory_space<vmem>>, %arg3: memref<1x320xf32, #tpu.memory_space<vmem>>, %arg4: memref<320x128xbf16, #tpu.memory_space<vmem>>, %arg5: memref<1x128xf32, #tpu.memory_space<vmem>>, %arg6: memref<32x128xf32, #tpu.memory_space<vmem>>) attributes {dimension_semantics = [#tpu.dimension_semantics<parallel>], iteration_bounds = array<i64: 2>, scalar_prefetch = 0 : i64, scratch_operands = 0 : i64, tpu.core_type = #tpu.core_type<tc>, window_params = [{transform_indices = @transform_0, window_bounds = array<i64: 32, 320>}, {pipeline_mode = #tpu.pipeline_mode<synchronous>, transform_indices = @transform_1, window_bounds = array<i64: 1, 320>}, {pipeline_mode = #tpu.pipeline_mode<synchronous>, transform_indices = @transform_2, window_bounds = array<i64: 1, 320>}, {pipeline_mode = #tpu.pipeline_mode<synchronous>, transform_indices = @transform_3, window_bounds = array<i64: 320, 128>}, {pipeline_mode = #tpu.pipeline_mode<synchronous>, transform_indices = @transform_4, window_bounds = array<i64: 1, 128>}, {transform_indices = @transform_5, window_bounds = array<i64: 32, 128>}]} {
    %c0 = arith.constant 0 : index
    %c0_0 = arith.constant 0 : index
    %0 = vector.load %arg1[%c0, %c0_0] : memref<32x320xf32, #tpu.memory_space<vmem>>, vector<32x320xf32>
    %cst = arith.constant dense<0.000000e+00> : vector<32xf32>
    %1 = vector.multi_reduction <add>, %0, %cst [1] : vector<32x320xf32> to vector<32xf32>
    %2 = vector.shape_cast %1 : vector<32xf32> to vector<32x1xf32>
    %cst_1 = arith.constant 3.200000e+02 : f32
    %3 = vector.broadcast %cst_1 : f32 to vector<32x1xf32>
    %4 = arith.divf %2, %3 : vector<32x1xf32>
    %5 = vector.broadcast %4 : vector<32x1xf32> to vector<32x320xf32>
    %6 = arith.subf %0, %5 : vector<32x320xf32>
    %7 = arith.mulf %6, %6 : vector<32x320xf32>
    %cst_2 = arith.constant dense<0.000000e+00> : vector<32xf32>
    %8 = vector.multi_reduction <add>, %7, %cst_2 [1] : vector<32x320xf32> to vector<32xf32>
    %9 = vector.shape_cast %8 : vector<32xf32> to vector<32x1xf32>
    %cst_3 = arith.constant 3.200000e+02 : f32
    %10 = vector.broadcast %cst_3 : f32 to vector<32x1xf32>
    %11 = arith.divf %9, %10 : vector<32x1xf32>
    %cst_4 = arith.constant 9.99999997E-7 : f32
    %12 = vector.broadcast %cst_4 : f32 to vector<32x1xf32>
    %13 = arith.addf %11, %12 : vector<32x1xf32>
    %14 = math.rsqrt %13 : vector<32x1xf32>
    %15 = vector.broadcast %14 : vector<32x1xf32> to vector<32x320xf32>
    %16 = arith.mulf %6, %15 : vector<32x320xf32>
    %c0_5 = arith.constant 0 : index
    %c0_6 = arith.constant 0 : index
    %17 = vector.load %arg2[%c0_5, %c0_6] : memref<1x320xf32, #tpu.memory_space<vmem>>, vector<1x320xf32>
    %18 = vector.broadcast %17 : vector<1x320xf32> to vector<32x320xf32>
    %19 = arith.mulf %16, %18 : vector<32x320xf32>
    %c0_7 = arith.constant 0 : index
    %c0_8 = arith.constant 0 : index
    %20 = vector.load %arg3[%c0_7, %c0_8] : memref<1x320xf32, #tpu.memory_space<vmem>>, vector<1x320xf32>
    %21 = vector.broadcast %20 : vector<1x320xf32> to vector<32x320xf32>
    %22 = arith.addf %19, %21 : vector<32x320xf32>
    %23 = arith.truncf %22 : vector<32x320xf32> to vector<32x320xbf16>
    %c0_9 = arith.constant 0 : index
    %c0_10 = arith.constant 0 : index
    %24 = vector.load %arg4[%c0_9, %c0_10] : memref<320x128xbf16, #tpu.memory_space<vmem>>, vector<320x128xbf16>
    %cst_11 = arith.constant dense<0.000000e+00> : vector<32x128xf32>
    %25 = tpu.matmul %23, %24, %cst_11 {dimension_numbers = #tpu.dot_dimension_numbers<[1], [0], [0], [1], [0, 0, 1, 1], [], []>} : vector<32x320xbf16>, vector<320x128xbf16>, vector<32x128xf32> -> vector<32x128xf32>
    %c0_12 = arith.constant 0 : index
    %c0_13 = arith.constant 0 : index
    %26 = vector.load %arg5[%c0_12, %c0_13] : memref<1x128xf32, #tpu.memory_space<vmem>>, vector<1x128xf32>
    %27 = vector.broadcast %26 : vector<1x128xf32> to vector<32x128xf32>
    %28 = arith.addf %25, %27 : vector<32x128xf32>
    %c0_14 = arith.constant 0 : index
    %c0_15 = arith.constant 0 : index
    %29 = vector.load %arg6[%c0_14, %c0_15] : memref<32x128xf32, #tpu.memory_space<vmem>>, vector<32x128xf32>
    tpu.vector_store %arg6[%c0_14, %c0_15], %28 {strides = array<i32>} : memref<32x128xf32, #tpu.memory_space<vmem>>, vector<32x128xf32>,
    return
  }
  func.func @transform_0(%arg0: i32) -> (i32, i32) {
    %c0_i32 = arith.constant 0 : i32
    %c0_i32_0 = arith.constant 0 : i32
    return %arg0, %c0_i32 : i32, i32
  }
  func.func @transform_1(%arg0: i32) -> (i32, i32) {
    %c0_i32 = arith.constant 0 : i32
    %c0_i32_0 = arith.constant 0 : i32
    %c0_i32_1 = arith.constant 0 : i32
    return %c0_i32, %c0_i32_0 : i32, i32
  }
  func.func @transform_2(%arg0: i32) -> (i32, i32) {
    %c0_i32 = arith.constant 0 : i32
    %c0_i32_0 = arith.constant 0 : i32
    %c0_i32_1 = arith.constant 0 : i32
    return %c0_i32, %c0_i32_0 : i32, i32
  }
  func.func @transform_3(%arg0: i32) -> (i32, i32) {
    %c0_i32 = arith.constant 0 : i32
    %c0_i32_0 = arith.constant 0 : i32
    %c0_i32_1 = arith.constant 0 : i32
    return %c0_i32, %c0_i32_0 : i32, i32
  }
  func.func @transform_4(%arg0: i32) -> (i32, i32) {
    %c0_i32 = arith.constant 0 : i32
    %c0_i32_0 = arith.constant 0 : i32
    %c0_i32_1 = arith.constant 0 : i32
    return %c0_i32, %c0_i32_0 : i32, i32
  }
  func.func @transform_5(%arg0: i32) -> (i32, i32) {
    %c0_i32 = arith.constant 0 : i32
    %c0_i32_0 = arith.constant 0 : i32
    return %arg0, %c0_i32 : i32, i32
  }
}

</mosaic_0001>

<llo_original>
// kernel: shifted_patch_tokenization.1
$region0: #{shifted_patch_tokenization.1}
  #allocation0 [shape = 'u32[]', space=smem, size = 0x4, offset = 0x4, fixed_abs, tag = 'smem constant byte address 0x4 - core index']
  #allocation1 [shape = 'u32[144,128]{1,0:T(1,128)}', space=vmem, size = 0x12000, scoped, tag = 'internal scratch']
  %s0 = inlined_call_operand.vmem [shape: f32[50,320], index: 0, kind: input, shape index: {}]
  %s1 = inlined_call_operand.vmem [shape: f32[1,320], index: 1, kind: input, shape index: {}]
  %s2 = inlined_call_operand.vmem [shape: f32[1,320], index: 2, kind: input, shape index: {}]
  %s3 = inlined_call_operand.vmem [shape: bf16[320,128], index: 3, kind: input, shape index: {}]
  %s4 = inlined_call_operand.vmem [shape: f32[1,128], index: 4, kind: input, shape index: {}]
  %s5 = inlined_call_operand.vmem [shape: f32[50,128], index: 5, kind: output, shape index: {}]
  %s6 = sld [smem:[#allocation0]]
  $region101: #{shifted_patch_tokenization.1} parent=0
    _
  %s8 = ssub.s32 1, %s6
  %s9 = scalar_select 0, %s8, %s6
  $region1: #{shifted_patch_tokenization.1} parent=0
    #allocation2 [shape = 'u8[32768]{0}', space=vmem, size = 0x8000, scoped, tag = 'output window, operand 0']
    loop: start=0, step=1, limit=4
    $region2: #{shifted_patch_tokenization.1} parent=1 // loop_pre_header
      _
    $region3: #{shifted_patch_tokenization.1} parent=1 // loop_header
      %s11 = sphi 0, %s15
      %p12 = scmp.ge.s32.totalorder %s11, 4
      %s21 = sphi 0, %s23
      %s24 = sphi 0, %s21
      %s25 = sphi 0, %s24
      %s41 = sphi 0, %s25
      %s45 = sphi 0, %s45
      %s47 = sphi 0, %s45
      %s48 = sphi 0, %s47
      %s62 = sphi 0, %s48
      %s66 = sphi 0, %s66
      %s68 = sphi 0, %s66
      %s69 = sphi 0, %s68
      %s83 = sphi 0, %s69
      %s87 = sphi 0, %s87
      %s89 = sphi 0, %s87
      %s90 = sphi 0, %s89
      %s104 = sphi 0, %s90
      %s108 = sphi 0, %s108
      %s110 = sphi 0, %s108
      %s111 = sphi 0, %s110
      %s125 = sphi 0, %s111
      %s131 = sphi 0, %s133
      %s134 = sphi 0, %s131
      %s135 = sphi 0, %s134
      %s151 = sphi 0, %s135
    $region4: #{shifted_patch_tokenization.1} parent=1 // loop_header_branch
      %14 = sbr.rel (%p12) target = $region8
    $region5: #{shifted_patch_tokenization.1} parent=1 // loop_body
      %s16 = ssub.s32 %s11, 1
      %s17 = ssub.s32 %s11, 2
      %s18 = sadd.s32 %s11, 1
      %s19 = ssub.s32 %s11, %s18
      %p20 = scmp.eq.s32.totalorder %s19, 0
      %s22 = sadd.s32 %s21, 1
      %s23 = scalar_select %p20, %s21, %s22
      %p26 = pneg %p20
      %p27 = scmp.eq.s32.totalorder %s11, 1
      %p28 = por %p26, %p27
      %p29 = scmp.ne.s32.totalorder %s21, %s24
      %p30 = scmp.eq.s32.totalorder %s11, 0
      %p31 = por %p29, %p30
      %p32 = scmp.ne.s32.totalorder %s21, %s24
      %p33 = scmp.eq.s32.totalorder %s16, 1
      %p34 = por %p32, %p33
      %p35 = scmp.ne.s32.totalorder %s24, %s25
      %p36 = scmp.eq.s32.totalorder %s16, 0
      %p37 = por %p35, %p36
      %p38 = scmp.ne.s32.totalorder %s24, %s25
      %p39 = scmp.eq.s32.totalorder %s17, 1
      %p40 = por %p38, %p39
      %p42 = scmp.ne.s32.totalorder %s25, %s41
      %p43 = scmp.eq.s32.totalorder %s17, 0
      %p44 = por %p42, %p43
      %s46 = sadd.s32 %s45, 1
      %p49 = scmp.eq.s32.totalorder %s11, 1
      %p50 = scmp.ne.s32.totalorder %s45, %s47
      %p51 = scmp.eq.s32.totalorder %s11, 0
      %p52 = por %p50, %p51
      %p53 = scmp.ne.s32.totalorder %s45, %s47
      %p54 = scmp.eq.s32.totalorder %s16, 1
      %p55 = por %p53, %p54
      %p56 = scmp.ne.s32.totalorder %s47, %s48
      %p57 = scmp.eq.s32.totalorder %s16, 0
      %p58 = por %p56, %p57
      %p59 = scmp.ne.s32.totalorder %s47, %s48
      %p60 = scmp.eq.s32.totalorder %s17, 1
      %p61 = por %p59, %p60
      %p63 = scmp.ne.s32.totalorder %s48, %s62
      %p64 = scmp.eq.s32.totalorder %s17, 0
      %p65 = por %p63, %p64
      %s67 = sadd.s32 %s66, 1
      %p70 = scmp.eq.s32.totalorder %s11, 1
      %p71 = scmp.ne.s32.totalorder %s66, %s68
      %p72 = scmp.eq.s32.totalorder %s11, 0
      %p73 = por %p71, %p72
      %p74 = scmp.ne.s32.totalorder %s66, %s68
      %p75 = scmp.eq.s32.totalorder %s16, 1
      %p76 = por %p74, %p75
      %p77 = scmp.ne.s32.totalorder %s68, %s69
      %p78 = scmp.eq.s32.totalorder %s16, 0
      %p79 = por %p77, %p78
      %p80 = scmp.ne.s32.totalorder %s68, %s69
      %p81 = scmp.eq.s32.totalorder %s17, 1
      %p82 = por %p80, %p81
      %p84 = scmp.ne.s32.totalorder %s69, %s83
      %p85 = scmp.eq.s32.totalorder %s17, 0
      %p86 = por %p84, %p85
      %s88 = sadd.s32 %s87, 1
      %p91 = scmp.eq.s32.totalorder %s11, 1
      %p92 = scmp.ne.s32.totalorder %s87, %s89
      %p93 = scmp.eq.s32.totalorder %s11, 0
      %p94 = por %p92, %p93
      %p95 = scmp.ne.s32.totalorder %s87, %s89
      %p96 = scmp.eq.s32.totalorder %s16, 1
      %p97 = por %p95, %p96
      %p98 = scmp.ne.s32.totalorder %s89, %s90
      %p99 = scmp.eq.s32.totalorder %s16, 0
      %p100 = por %p98, %p99
      %p101 = scmp.ne.s32.totalorder %s89, %s90
      %p102 = scmp.eq.s32.totalorder %s17, 1
      %p103 = por %p101, %p102
      %p105 = scmp.ne.s32.totalorder %s90, %s104
      %p106 = scmp.eq.s32.totalorder %s17, 0
      %p107 = por %p105, %p106
      %s109 = sadd.s32 %s108, 1
      %p112 = scmp.eq.s32.totalorder %s11, 1
      %p113 = scmp.ne.s32.totalorder %s108, %s110
      %p114 = scmp.eq.s32.totalorder %s11, 0
      %p115 = por %p113, %p114
      %p116 = scmp.ne.s32.totalorder %s108, %s110
      %p117 = scmp.eq.s32.totalorder %s16, 1
      %p118 = por %p116, %p117
      %p119 = scmp.ne.s32.totalorder %s110, %s111
      %p120 = scmp.eq.s32.totalorder %s16, 0
      %p121 = por %p119, %p120
      %p122 = scmp.ne.s32.totalorder %s110, %s111
      %p123 = scmp.eq.s32.totalorder %s17, 1
      %p124 = por %p122, %p123
      %p126 = scmp.ne.s32.totalorder %s111, %s125
      %p127 = scmp.eq.s32.totalorder %s17, 0
      %p128 = por %p126, %p127
      %s129 = ssub.s32 %s11, %s18
      %p130 = scmp.eq.s32.totalorder %s129, 0
      %s132 = sadd.s32 %s131, 1
      %s133 = scalar_select %p130, %s131, %s132
      %p136 = pneg %p130
      %p137 = scmp.eq.s32.totalorder %s11, 1
      %p138 = por %p136, %p137
      %p139 = scmp.ne.s32.totalorder %s131, %s134
      %p140 = scmp.eq.s32.totalorder %s11, 0
      %p141 = por %p139, %p140
      %p142 = scmp.ne.s32.totalorder %s131, %s134
      %p143 = scmp.eq.s32.totalorder %s16, 1
      %p144 = por %p142, %p143
      %p145 = scmp.ne.s32.totalorder %s134, %s135
      %p146 = scmp.eq.s32.totalorder %s16, 0
      %p147 = por %p145, %p146
      %p148 = scmp.ne.s32.totalorder %s134, %s135
      %p149 = scmp.eq.s32.totalorder %s17, 1
      %p150 = por %p148, %p149
      %p152 = scmp.ne.s32.totalorder %s135, %s151
      %p153 = scmp.eq.s32.totalorder %s17, 0
      %p154 = por %p152, %p153
      %p155 = scmp.le.s32.totalorder 1, %s11
      %p156 = scmp.lt.s32.totalorder %s11, 3
      %p157 = pnand %p155, %p156
      %p158 = pneg %p157
      // Predicated region
      $region9: #{shifted_patch_tokenization.1} parent=5 // pred_check
        _
      $region10: #{shifted_patch_tokenization.1} parent=5 // pred_check_branch
        %160 = sbr.rel (%p157) target = $region12
      $region11: #{shifted_patch_tokenization.1} parent=5 // pred_region
        %s161 = ssub.s32 %s11, 1
        // Predicated region
        $region13: #{shifted_patch_tokenization.1} parent=11 // pred_check
          %p162 = pneg %p58
        $region14: #{shifted_patch_tokenization.1} parent=11 // pred_check_branch
          %164 = sbr.rel (%p162) target = $region16
        $region15: #{shifted_patch_tokenization.1} parent=11 // pred_region
          _
        $region16: #{shifted_patch_tokenization.1} parent=11 // pred_fallthru
          _
        // Predicated region
        $region17: #{shifted_patch_tokenization.1} parent=11 // pred_check
          %p165 = pneg %p79
        $region18: #{shifted_patch_tokenization.1} parent=11 // pred_check_branch
          %167 = sbr.rel (%p165) target = $region20
        $region19: #{shifted_patch_tokenization.1} parent=11 // pred_region
          _
        $region20: #{shifted_patch_tokenization.1} parent=11 // pred_fallthru
          _
        // Predicated region
        $region21: #{shifted_patch_tokenization.1} parent=11 // pred_check
          %p168 = pneg %p100
        $region22: #{shifted_patch_tokenization.1} parent=11 // pred_check_branch
          %170 = sbr.rel (%p168) target = $region24
        $region23: #{shifted_patch_tokenization.1} parent=11 // pred_region
          _
        $region24: #{shifted_patch_tokenization.1} parent=11 // pred_fallthru
          _
        // Predicated region
        $region25: #{shifted_patch_tokenization.1} parent=11 // pred_check
          %p171 = pneg %p121
        $region26: #{shifted_patch_tokenization.1} parent=11 // pred_check_branch
          %173 = sbr.rel (%p171) target = $region28
        $region27: #{shifted_patch_tokenization.1} parent=11 // pred_region
          _
        $region28: #{shifted_patch_tokenization.1} parent=11 // pred_fallthru
          _
      $region12: #{shifted_patch_tokenization.1} parent=5 // pred_fallthru
        _
      %p174 = scmp.lt.s32.totalorder %s11, 2
      // Predicated region
      $region29: #{shifted_patch_tokenization.1} parent=5 // pred_check
        %p175 = pneg %p174
      $region30: #{shifted_patch_tokenization.1} parent=5 // pred_check_branch
        %177 = sbr.rel (%p175) target = $region32
      $region31: #{shifted_patch_tokenization.1} parent=5 // pred_region
        // Predicated region
        $region33: #{shifted_patch_tokenization.1} parent=31 // pred_check
          %p178 = pneg %p31
        $region34: #{shifted_patch_tokenization.1} parent=31 // pred_check_branch
          %180 = sbr.rel (%p178) target = $region36
        $region35: #{shifted_patch_tokenization.1} parent=31 // pred_region
          %s181 = smul.u32 4, %s11
          %s182 = ssub.s32 7, %s181
          %p183 = scmp.lt.s32.totalorder %s182, 4
          %s184 = scalar_select %p183, %s182, 4
          %s185 = smul.u32 128, %s184
          %s186 = smul.u32 %s185, 3
          %p187 = scmp.lt.s32.totalorder %s181, 6
          %s188 = scalar_select %p187, %s181, 6
          %s189 = smul.addr %s188, 3
          %s190 = smul.addr %s189, 8
          %s191 = scalar_lea.vmem %s0, %s190
          %s192 = smul.u32 4, %s11
          %s193 = ssub.s32 7, %s192
          %p194 = scmp.lt.s32.totalorder %s193, 4
          %s195 = scalar_select %p194, %s193, 4
          %s196 = smul.u32 128, %s195
          %s197 = smul.u32 %s196, 3
        $region36: #{shifted_patch_tokenization.1} parent=31 // pred_fallthru
          _
      $region32: #{shifted_patch_tokenization.1} parent=5 // pred_fallthru
        _
      %p198 = scmp.le.s32.totalorder 1, %s11
      %p199 = scmp.lt.s32.totalorder %s11, 3
      %p200 = pnand %p198, %p199
      %p201 = pneg %p200
      // Predicated region
      $region37: #{shifted_patch_tokenization.1} parent=5 // pred_check
        _
      $region38: #{shifted_patch_tokenization.1} parent=5 // pred_check_branch
        %203 = sbr.rel (%p200) target = $region40
      $region39: #{shifted_patch_tokenization.1} parent=5 // pred_region
        %s204 = ssub.s32 %s11, 1
        %s205 = smul.u32 4, %s16
        %s206 = ssub.s32 7, %s205
        %p207 = scmp.lt.s32.totalorder %s206, 4
        %s208 = scalar_select %p207, %s206, 4
        %s209 = smul.u32 128, %s208
        %s210 = smul.u32 %s209, 3
        %p211 = scmp.lt.s32.totalorder %s205, 6
        %s212 = scalar_select %p211, %s205, 6
        %s213 = smul.addr %s212, 3
        %s214 = smul.addr %s213, 8
        %s215 = scalar_lea.vmem %s0, %s214
        %p216 = pneg %p37
        %p217 = pneg %p34
        %p218 = pneg %p58
        %p219 = pneg %p55
        %p220 = pneg %p79
        %p221 = pneg %p76
        %p222 = pneg %p100
        %p223 = pneg %p97
        %p224 = pneg %p121
        %p225 = pneg %p118
        %p226 = pneg %p147
        %p227 = pneg %p144
        %s228 = sand.u32 %s134, 1
        %s229 = sand.u32 %s134, 1
        %s230 = smul.addr %s229, 32
        %s231 = scalar_lea.vmem [#allocation2], %s230
        %s232 = smul.u32 4, %s16
        %s233 = ssub.s32 7, %s232
        %p234 = scmp.lt.s32.totalorder %s233, 4
        %s235 = scalar_select %p234, %s233, 4
        %s236 = smul.u32 128, %s235
        %s237 = smul.u32 %s236, 3
        %p238 = scmp.lt.s32.totalorder %s232, 6
        %s239 = scalar_select %p238, %s232, 6
        %s240 = smul.addr %s239, 3
        %s241 = smul.addr %s240, 8
        %s242 = scalar_lea.vmem %s0, %s241
        %s243 = smul.u32 4, %s16
        %s244 = ssub.s32 7, %s243
        %p245 = scmp.lt.s32.totalorder %s244, 4
        %s246 = scalar_select %p245, %s244, 4
        %s247 = smul.u32 128, %s246
        %s248 = smul.u32 %s247, 3
        %s249 = smul.u32 4, %s16
        %s250 = ssub.s32 7, %s249
        %p251 = scmp.lt.s32.totalorder %s250, 4
        %s252 = scalar_select %p251, %s250, 4
        %s253 = smul.u32 128, %s252
        %v255 = vld [vmem:[%s242] sm:$0xff]
        %v256 = vld [vmem:[%s242 + $0x8] sm:$0xff]
        %v257 = vld [vmem:[%s242 + $0x10] sm:$0xff]
        %v258 = vld [vmem:[%s242 + $0x18] sm:$0xff]
        %v259 = vld [vmem:[%s242 + $0x20] sm:$0xff]
        %v260 = vld [vmem:[%s242 + $0x28] sm:$0xff]
        %v261 = vld [vmem:[%s242 + $0x30] sm:$0xff]
        %v262 = vld [vmem:[%s242 + $0x38] sm:$0xff]
        %v263 = vld [vmem:[%s242 + $0x40] sm:$0xff]
        %v264 = vld [vmem:[%s242 + $0x48] sm:$0xff]
        %v265 = vld [vmem:[%s242 + $0x50] sm:$0xff]
        %v266 = vld [vmem:[%s242 + $0x58] sm:$0xff]
        %v267 = vadd.f32 %v255, %v256
        %vm268 = vcmask 523264
        %v269 = vsel %vm268, %v257, 0.0
        %v270 = vadd.f32 %v267, %v269
        %271 = vadd.xlane.f32.xlu0 %v270
        %v272 = vpop.xlane.xlu0 %271
        %v273 = vadd.f32 %v258, %v259
        %v274 = vsel %vm268, %v260, 0.0
        %v275 = vadd.f32 %v273, %v274
        %276 = vadd.xlane.f32.xlu0 %v275
        %v277 = vpop.xlane.xlu0 %276
        %v278 = vadd.f32 %v261, %v262
        %v279 = vsel %vm268, %v263, 0.0
        %v280 = vadd.f32 %v278, %v279
        %281 = vadd.xlane.f32.xlu0 %v280
        %v282 = vpop.xlane.xlu0 %281
        %v283 = vadd.f32 %v264, %v265
        %v284 = vsel %vm268, %v266, 0.0
        %v285 = vadd.f32 %v283, %v284
        %286 = vadd.xlane.f32.xlu0 %v285
        %v287 = vpop.xlane.xlu0 %286
        %v288 = vrcp.pop 320.0
        %v289 = vmul.f32 %v272, %v288
        %v290 = vmul.f32 %v277, %v288
        %v291 = vmul.f32 %v282, %v288
        %v292 = vmul.f32 %v287, %v288
        %v293 = vsub.f32 %v255, %v289
        %v294 = vsub.f32 %v256, %v289
        %v295 = vsub.f32 %v257, %v289
        %v296 = vsub.f32 %v258, %v290
        %v297 = vsub.f32 %v259, %v290
        %v298 = vsub.f32 %v260, %v290
        %v299 = vsub.f32 %v261, %v291
        %v300 = vsub.f32 %v262, %v291
        %v301 = vsub.f32 %v263, %v291
        %v302 = vsub.f32 %v264, %v292
        %v303 = vsub.f32 %v265, %v292
        %v304 = vsub.f32 %v266, %v292
        %v305 = vmul.f32 %v293, %v293
        %v306 = vmul.f32 %v294, %v294
        %v307 = vmul.f32 %v295, %v295
        %v308 = vmul.f32 %v296, %v296
        %v309 = vmul.f32 %v297, %v297
        %v310 = vmul.f32 %v298, %v298
        %v311 = vmul.f32 %v299, %v299
        %v312 = vmul.f32 %v300, %v300
        %v313 = vmul.f32 %v301, %v301
        %v314 = vmul.f32 %v302, %v302
        %v315 = vmul.f32 %v303, %v303
        %v316 = vmul.f32 %v304, %v304
        %v317 = vadd.f32 %v305, %v306
        %v318 = vsel %vm268, %v307, 0.0
        %v319 = vadd.f32 %v317, %v318
        %320 = vadd.xlane.f32.xlu0 %v319
        %v321 = vpop.xlane.xlu0 %320
        %v322 = vadd.f32 %v308, %v309
        %v323 = vsel %vm268, %v310, 0.0
        %v324 = vadd.f32 %v322, %v323
        %325 = vadd.xlane.f32.xlu0 %v324
        %v326 = vpop.xlane.xlu0 %325
        %v327 = vadd.f32 %v311, %v312
        %v328 = vsel %vm268, %v313, 0.0
        %v329 = vadd.f32 %v327, %v328
        %330 = vadd.xlane.f32.xlu0 %v329
        %v331 = vpop.xlane.xlu0 %330
        %v332 = vadd.f32 %v314, %v315
        %v333 = vsel %vm268, %v316, 0.0
        %v334 = vadd.f32 %v332, %v333
        %335 = vadd.xlane.f32.xlu0 %v334
        %v336 = vpop.xlane.xlu0 %335
        %v337 = vmul.f32 %v321, %v288
        %v338 = vmul.f32 %v326, %v288
        %v339 = vmul.f32 %v331, %v288
        %v340 = vmul.f32 %v336, %v288
        %v341 = vadd.f32 %v337, 1e-06
        %v342 = vadd.f32 %v338, 1e-06
        %v343 = vadd.f32 %v339, 1e-06
        %v344 = vadd.f32 %v340, 1e-06
        %v345 = vrsqrt.pop %v341
        %v346 = vrsqrt.pop %v342
        %v347 = vrsqrt.pop %v343
        %v348 = vrsqrt.pop %v344
        %v349 = vmul.f32 %v293, %v345
        %v350 = vmul.f32 %v294, %v345
        %v351 = vmul.f32 %v295, %v345
        %v352 = vmul.f32 %v296, %v346
        %v353 = vmul.f32 %v297, %v346
        %v354 = vmul.f32 %v298, %v346
        %v355 = vmul.f32 %v299, %v347
        %v356 = vmul.f32 %v300, %v347
        %v357 = vmul.f32 %v301, %v347
        %v358 = vmul.f32 %v302, %v348
        %v359 = vmul.f32 %v303, %v348
        %v360 = vmul.f32 %v304, %v348
        %v361 = vld [vmem:[%s1] sm:$0x7]
        %v363 = vlaneseq
        %v364 = vshrl.u32 %v363, 7
        %v365 = vsub.s32 0, %v364
        %v366 = vrot.slane %v361, %v365
        %v367 = vlaneseq
        %v368 = vshrl.u32 %v367, 7
        %v369 = vsub.s32 1, %v368
        %v370 = vrot.slane %v361, %v369
        %v371 = vlaneseq
        %v372 = vshrl.u32 %v371, 7
        %v373 = vsub.s32 2, %v372
        %v374 = vrot.slane %v361, %v373
        %v378 = vmul.f32 %v349, %v366
        %v379 = vmul.f32 %v350, %v370
        %v380 = vmul.f32 %v351, %v374
        %v381 = vmul.f32 %v352, %v366
        %v382 = vmul.f32 %v353, %v370
        %v383 = vmul.f32 %v354, %v374
        %v384 = vmul.f32 %v355, %v366
        %v385 = vmul.f32 %v356, %v370
        %v386 = vmul.f32 %v357, %v374
        %v387 = vmul.f32 %v358, %v366
        %v388 = vmul.f32 %v359, %v370
        %v389 = vmul.f32 %v360, %v374
        %v390 = vld [vmem:[%s2] sm:$0x7]
        %v392 = vlaneseq
        %v393 = vshrl.u32 %v392, 7
        %v394 = vsub.s32 0, %v393
        %v395 = vrot.slane %v390, %v394
        %v396 = vlaneseq
        %v397 = vshrl.u32 %v396, 7
        %v398 = vsub.s32 1, %v397
        %v399 = vrot.slane %v390, %v398
        %v400 = vlaneseq
        %v401 = vshrl.u32 %v400, 7
        %v402 = vsub.s32 2, %v401
        %v403 = vrot.slane %v390, %v402
        %v407 = vadd.f32 %v378, %v395
        %v408 = vadd.f32 %v379, %v399
        %v409 = vadd.f32 %v380, %v403
        %v410 = vadd.f32 %v381, %v395
        %v411 = vadd.f32 %v382, %v399
        %v412 = vadd.f32 %v383, %v403
        %v413 = vadd.f32 %v384, %v395
        %v414 = vadd.f32 %v385, %v399
        %v415 = vadd.f32 %v386, %v403
        %v416 = vadd.f32 %v387, %v395
        %v417 = vadd.f32 %v388, %v399
        %v418 = vadd.f32 %v389, %v403
        %v419 = vpack.c.bf16 %v410, %v407
        %v420 = vpack.c.bf16 %v411, %v408
        %v421 = vpack.c.bf16 %v412, %v409
        %v422 = vpack.c.bf16 %v416, %v413
        %v423 = vpack.c.bf16 %v417, %v414
        %v424 = vpack.c.bf16 %v418, %v415
        %v425 = vld [vmem:[%s3] sm:$0xf]
        %v426 = vld [vmem:[%s3 + $0x4] sm:$0xf]
        %v427 = vld [vmem:[%s3 + $0x8] sm:$0xf]
        %v428 = vld [vmem:[%s3 + $0xc] sm:$0xf]
        %v429 = vld [vmem:[%s3 + $0x10] sm:$0xf]
        %v430 = vld [vmem:[%s3 + $0x14] sm:$0xf]
        %v431 = vld [vmem:[%s3 + $0x18] sm:$0xf]
        %v432 = vld [vmem:[%s3 + $0x1c] sm:$0xf]
        %v433 = vld [vmem:[%s3 + $0x20] sm:$0xf]
        %v434 = vld [vmem:[%s3 + $0x24] sm:$0xf]
        %v435 = vld [vmem:[%s3 + $0x28] sm:$0xf]
        %v436 = vld [vmem:[%s3 + $0x2c] sm:$0xf]
        %v437 = vld [vmem:[%s3 + $0x30] sm:$0xf]
        %v438 = vld [vmem:[%s3 + $0x34] sm:$0xf]
        %v439 = vld [vmem:[%s3 + $0x38] sm:$0xf]
        %v440 = vld [vmem:[%s3 + $0x3c] sm:$0xf]
        %v441 = vld [vmem:[%s3 + $0x40] sm:$0xf]
        %v442 = vld [vmem:[%s3 + $0x44] sm:$0xf]
        %v443 = vld [vmem:[%s3 + $0x48] sm:$0xf]
        %v444 = vld [vmem:[%s3 + $0x4c] sm:$0xf]
        %v445 = vld [vmem:[%s3 + $0x50] sm:$0xf]
        %v446 = vld [vmem:[%s3 + $0x54] sm:$0xf]
        %v447 = vld [vmem:[%s3 + $0x58] sm:$0xf]
        %v448 = vld [vmem:[%s3 + $0x5c] sm:$0xf]
        %v449 = vld [vmem:[%s3 + $0x60] sm:$0xf]
        %v450 = vld [vmem:[%s3 + $0x64] sm:$0xf]
        %v451 = vld [vmem:[%s3 + $0x68] sm:$0xf]
        %v452 = vld [vmem:[%s3 + $0x6c] sm:$0xf]
        %v453 = vld [vmem:[%s3 + $0x70] sm:$0xf]
        %v454 = vld [vmem:[%s3 + $0x74] sm:$0xf]
        %v455 = vld [vmem:[%s3 + $0x78] sm:$0xf]
        %v456 = vld [vmem:[%s3 + $0x7c] sm:$0xf]
        %v457 = vld [vmem:[%s3 + $0x80] sm:$0xf]
        %v458 = vld [vmem:[%s3 + $0x84] sm:$0xf]
        %v459 = vld [vmem:[%s3 + $0x88] sm:$0xf]
        %v460 = vld [vmem:[%s3 + $0x8c] sm:$0xf]
        %v461 = vld [vmem:[%s3 + $0x90] sm:$0xf]
        %v462 = vld [vmem:[%s3 + $0x94] sm:$0xf]
        %v463 = vld [vmem:[%s3 + $0x98] sm:$0xf]
        %v464 = vld [vmem:[%s3 + $0x9c] sm:$0xf]
        %v465 = vld [vmem:[%s4] sm:$0x1]
        %v467 = vlaneseq
        %v468 = vshrl.u32 %v467, 7
        %v469 = vsub.s32 0, %v468
        %v470 = vrot.slane %v465, %v469
        %v512 = vunpack.c.l.b16 %v425
        %v513 = vunpack.c.l.b16 %v426
        %v514 = vunpack.c.l.b16 %v427
        %v515 = vunpack.c.l.b16 %v428
        %v516 = vunpack.c.l.b16 %v429
        %v517 = vunpack.c.l.b16 %v430
        %v518 = vunpack.c.l.b16 %v431
        %v519 = vunpack.c.l.b16 %v432
        %v520 = vunpack.c.l.b16 %v433
        %v521 = vunpack.c.l.b16 %v434
        %v522 = vunpack.c.l.b16 %v435
        %v523 = vunpack.c.l.b16 %v436
        %v524 = vunpack.c.l.b16 %v437
        %v525 = vunpack.c.l.b16 %v438
        %v526 = vunpack.c.l.b16 %v439
        %v527 = vunpack.c.l.b16 %v440
        %v528 = vunpack.c.l.b16 %v441
        %v529 = vunpack.c.l.b16 %v442
        %v530 = vunpack.c.l.b16 %v443
        %v531 = vunpack.c.l.b16 %v444
        %v532 = vunpack.c.l.b16 %v445
        %v533 = vunpack.c.l.b16 %v446
        %v534 = vunpack.c.l.b16 %v447
        %v535 = vunpack.c.l.b16 %v448
        %v536 = vunpack.c.l.b16 %v449
        %v537 = vunpack.c.l.b16 %v450
        %v538 = vunpack.c.l.b16 %v451
        %v539 = vunpack.c.l.b16 %v452
        %v540 = vunpack.c.l.b16 %v453
        %v541 = vunpack.c.l.b16 %v454
        %v542 = vunpack.c.l.b16 %v455
        %v543 = vunpack.c.l.b16 %v456
        %v544 = vunpack.c.l.b16 %v457
        %v545 = vunpack.c.l.b16 %v458
        %v546 = vunpack.c.l.b16 %v459
        %v547 = vunpack.c.l.b16 %v460
        %v548 = vunpack.c.l.b16 %v461
        %v549 = vunpack.c.l.b16 %v462
        %v550 = vunpack.c.l.b16 %v463
        %v551 = vunpack.c.l.b16 %v464
        %v552 = vpack.c.b16 %v513, %v512
        %v553 = vpack.c.b16 %v515, %v514
        %v554 = vpack.c.b16 %v517, %v516
        %v555 = vpack.c.b16 %v519, %v518
        %v556 = vpack.c.b16 %v521, %v520
        %v557 = vpack.c.b16 %v523, %v522
        %v558 = vpack.c.b16 %v525, %v524
        %v559 = vpack.c.b16 %v527, %v526
        %v560 = vpack.c.b16 %v529, %v528
        %v561 = vpack.c.b16 %v531, %v530
        %v562 = vpack.c.b16 %v533, %v532
        %v563 = vpack.c.b16 %v535, %v534
        %v564 = vpack.c.b16 %v537, %v536
        %v565 = vpack.c.b16 %v539, %v538
        %v566 = vpack.c.b16 %v541, %v540
        %v567 = vpack.c.b16 %v543, %v542
        %v568 = vpack.c.b16 %v545, %v544
        %v569 = vpack.c.b16 %v547, %v546
        %v570 = vpack.c.b16 %v549, %v548
        %v571 = vpack.c.b16 %v551, %v550
        %v593 = vsel %vm268, %v421, 0
        %v596 = vsel %vm268, %v424, 0
        %598 = vmatprep.subr.bf16.mxu0 0
        %599 = vmatpush1.bf16.msra.mxu0 %v552
        %600 = vmatprep.subr.bf16.mxu0 0
        %601 = vmatpush1.bf16.msra.mxu0 %v553
        %602 = vmatprep.subr.bf16.mxu0 0
        %603 = vmatpush1.bf16.msra.mxu0 %v554
        %604 = vmatprep.subr.bf16.mxu0 0
        %605 = vmatpush1.bf16.msra.mxu0 %v555
        %606 = vmatprep.subr.bf16.mxu0 0
        %607 = vmatpush1.bf16.msra.mxu0 %v556
        %608 = vmatprep.subr.bf16.mxu0 0
        %609 = vmatpush1.bf16.msra.mxu0 %v557
        %610 = vmatprep.subr.bf16.mxu0 0
        %611 = vmatpush1.bf16.msra.mxu0 %v558
        %612 = vmatprep.subr.bf16.mxu0 0
        %613 = vmatpush1.bf16.msra.mxu0 %v559
        %614 = vmatprep.subr.bf16.mxu0 0
        %615 = vmatpush1.bf16.msra.mxu0 %v560
        %616 = vmatprep.subr.bf16.mxu0 0
        %617 = vmatpush1.bf16.msra.mxu0 %v561
        %618 = vmatprep.subr.bf16.mxu0 0
        %619 = vmatpush1.bf16.msra.mxu0 %v562
        %620 = vmatprep.subr.bf16.mxu0 0
        %621 = vmatpush1.bf16.msra.mxu0 %v563
        %622 = vmatprep.subr.bf16.mxu0 0
        %623 = vmatpush1.bf16.msra.mxu0 %v564
        %624 = vmatprep.subr.bf16.mxu0 0
        %625 = vmatpush1.bf16.msra.mxu0 %v565
        %626 = vmatprep.subr.bf16.mxu0 0
        %627 = vmatpush1.bf16.msra.mxu0 %v566
        %628 = vmatprep.subr.bf16.mxu0 0
        %629 = vmatpush1.bf16.msra.mxu0 %v567
        %630 = vmatprep.mubr.bf16.mxu0 %v420
        %631 = vmatmul.mubr.bf16.gmra.mrb[0].mxu0 %v419
        %v632 = vpop.f32.mrb[0].mxu0
        %v633 = vadd.f32 %v470, %v632
        %v634 = vpop.f32.mrb[0].mxu0
        %v635 = vpop.f32.mrb[0].mxu0
        %v636 = vadd.f32 %v470, %v635
        %v637 = vpop.f32.mrb[0].mxu0
        %638 = vmatprep.mubr.bf16.mxu0 %v423
        %639 = vmatmul.mubr.bf16.gmra.mrb[0].mxu0 %v422
        %v640 = vpop.f32.mrb[0].mxu0
        %v641 = vadd.f32 %v470, %v640
        %v642 = vpop.f32.mrb[0].mxu0
        %v643 = vpop.f32.mrb[0].mxu0
        %v644 = vadd.f32 %v470, %v643
        %v645 = vpop.f32.mrb[0].mxu0
        %646 = vdwg.mxu0
        %647 = vmatprep.subr.bf16.mxu0 0
        %648 = vmatpush1.bf16.msra.mxu0 %v568
        %649 = vmatprep.subr.bf16.mxu0 0
        %650 = vmatpush1.bf16.msra.mxu0 %v569
        %651 = vmatprep.subr.bf16.mxu0 0
        %652 = vmatpush1.bf16.msra.mxu0 %v570
        %653 = vmatprep.subr.bf16.mxu0 0
        %654 = vmatpush1.bf16.msra.mxu0 %v571
        %655 = vmatprep.subr.bf16.mxu0 0
        %656 = vmatpush1.bf16.msra.mxu0 0
        %657 = vmatprep.subr.bf16.mxu0 0
        %658 = vmatpush1.bf16.msra.mxu0 0
        %659 = vmatprep.subr.bf16.mxu0 0
        %660 = vmatpush1.bf16.msra.mxu0 0
        %661 = vmatprep.subr.bf16.mxu0 0
        %662 = vmatpush1.bf16.msra.mxu0 0
        %663 = vmatprep.subr.bf16.mxu0 0
        %664 = vmatpush1.bf16.msra.mxu0 0
        %665 = vmatprep.subr.bf16.mxu0 0
        %666 = vmatpush1.bf16.msra.mxu0 0
        %667 = vmatprep.subr.bf16.mxu0 0
        %668 = vmatpush1.bf16.msra.mxu0 0
        %669 = vmatprep.subr.bf16.mxu0 0
        %670 = vmatpush1.bf16.msra.mxu0 0
        %671 = vmatprep.subr.bf16.mxu0 0
        %672 = vmatpush1.bf16.msra.mxu0 0
        %673 = vmatprep.subr.bf16.mxu0 0
        %674 = vmatpush1.bf16.msra.mxu0 0
        %675 = vmatprep.subr.bf16.mxu0 0
        %676 = vmatpush1.bf16.msra.mxu0 0
        %677 = vmatprep.subr.bf16.mxu0 0
        %678 = vmatpush1.bf16.msra.mxu0 0
        %679 = vmatprep.mubr.bf16.mxu0 0
        %680 = vmatmul.mubr.bf16.gmra.mrb[0].mxu0 %v593
        %v681 = vpop.f32.mrb[0].mxu0
        %v682 = vadd.f32 %v633, %v681
        %v683 = vpop.f32.mrb[0].mxu0
        %v684 = vpop.f32.mrb[0].mxu0
        %v685 = vadd.f32 %v636, %v684
        %v686 = vpop.f32.mrb[0].mxu0
        %687 = vmatprep.mubr.bf16.mxu0 0
        %688 = vmatmul.mubr.bf16.gmra.mrb[0].mxu0 %v596
        %v689 = vpop.f32.mrb[0].mxu0
        %v690 = vadd.f32 %v641, %v689
        %v691 = vpop.f32.mrb[0].mxu0
        %v692 = vpop.f32.mrb[0].mxu0
        %v693 = vadd.f32 %v644, %v692
        %v694 = vpop.f32.mrb[0].mxu0
        %695 = vdwg.mxu0
        %696 = vst [vmem:[%s231] sm:$0xff] %v682
        %697 = vst [vmem:[%s231 + $0x8] sm:$0xff] %v685
        %698 = vst [vmem:[%s231 + $0x10] sm:$0xff] %v690
        %699 = vst [vmem:[%s231 + $0x18] sm:$0xff] %v693
        %s700 = sand.u32 %s134, 1
        %s701 = sand.u32 %s134, 1
        %s702 = smul.addr %s701, 32
        %s703 = scalar_lea.vmem [#allocation2], %s702
        // Predicated region
        $region41: #{shifted_patch_tokenization.1} parent=39 // pred_check
          %p704 = pneg %p144
        $region42: #{shifted_patch_tokenization.1} parent=39 // pred_check_branch
          %706 = sbr.rel (%p704) target = $region44
        $region43: #{shifted_patch_tokenization.1} parent=39 // pred_region
          %s707 = smul.u32 4, %s16
          %s708 = ssub.s32 7, %s707
          %p709 = scmp.lt.s32.totalorder %s708, 4
          %s710 = scalar_select %p709, %s708, 4
          %s711 = smul.u32 128, %s710
          %p712 = scmp.ne.s32.totalorder 0, %s711
          %s713 = smul.addr %s707, 8
          %s714 = scalar_lea.vmem %s5, %s713
          // Predicated region
          $region45: #{shifted_patch_tokenization.1} parent=43 // pred_check
            %p715 = pneg %p712
          $region46: #{shifted_patch_tokenization.1} parent=43 // pred_check_branch
            %717 = sbr.rel (%p715) target = $region48
          $region47: #{shifted_patch_tokenization.1} parent=43 // pred_region
            // Predicated region
            $region49: #{shifted_patch_tokenization.1} parent=47 // pred_check
              _
            $region50: #{shifted_patch_tokenization.1} parent=47 // pred_check_branch
              %719 = sbr.rel (0) target = $region52
            $region51: #{shifted_patch_tokenization.1} parent=47 // pred_region
              // Predicated region
              $region71: #{shifted_patch_tokenization.1} parent=51 // pred_check
                _
              $region72: #{shifted_patch_tokenization.1} parent=51 // pred_check_branch
                %774 = sbr.rel (0) target = $region74
              $region73: #{shifted_patch_tokenization.1} parent=51 // pred_region
                %s775 = sshrl.u32 %s710, 2
                // While loop
                $region75: #{shifted_patch_tokenization.1} parent=73 // loop_pre_header
                  _
                $region76: #{shifted_patch_tokenization.1} parent=73 // loop_header
                  %s777 = sphi 0, %s779
                  %p778 = scmp.ge.s32.totalorder %s777, %s775
                  %s782 = sphi 0, %s795
                  %s783 = sphi %s703, %s798
                  %s784 = sphi %s714, %s799
                $region77: #{shifted_patch_tokenization.1} parent=73 // loop_header_branch
                  %781 = sbr.rel (%p778) target = $region81
                $region78: #{shifted_patch_tokenization.1} parent=73 // loop_body
                  %v785 = vld [vmem:[%s783] sm:$0xff]
                  %786 = vst [vmem:[%s784] sm:$0xff] %v785
                  %v787 = vld [vmem:[%s783 + $0x8] sm:$0xff]
                  %788 = vst [vmem:[%s784 + $0x8] sm:$0xff] %v787
                  %v789 = vld [vmem:[%s783 + $0x10] sm:$0xff]
                  %790 = vst [vmem:[%s784 + $0x10] sm:$0xff] %v789
                  %v791 = vld [vmem:[%s783 + $0x18] sm:$0xff]
                  %792 = vst [vmem:[%s784 + $0x18] sm:$0xff] %v791
                  %s793 = sadd.s32 1, %s782
                  %p794 = scmp.ge.s32.totalorder %s793, %s775
                  %s795 = scalar_select %p794, 0, %s793
                  %s796 = smul.u32 %s795, 32
                  %s797 = smul.u32 %s795, 32
                  %s798 = scalar_lea.vmem %s703, %s796 [#allocation2]
                  %s799 = scalar_lea.vmem %s714, %s797
                $region79: #{shifted_patch_tokenization.1} parent=73 // loop_footer
                  %s779 = sadd.s32 %s777, 1
                $region80: #{shifted_patch_tokenization.1} parent=73 // loop_footer_branch
                  %776 = sbr.rel target = $region76
                $region81: #{shifted_patch_tokenization.1} parent=73 // loop_exit
                  _
                %s800 = sshrl.u32 %s710, 2
                %s801 = sand.u32 %s710, 3
                %s802 = smul.u32 %s800, 4
                %s803 = smul.u32 8, %s802
                %s804 = scalar_lea.vmem %s703, %s803 [#allocation2]
                %s805 = smul.u32 8, %s802
                %s806 = scalar_lea.vmem %s714, %s805
                // While loop
                $region82: #{shifted_patch_tokenization.1} parent=73 // loop_pre_header
                  _
                $region83: #{shifted_patch_tokenization.1} parent=73 // loop_header
                  %s808 = sphi 0, %s810
                  %p809 = scmp.ge.s32.totalorder %s808, %s801
                  %s813 = sphi 0, %s820
                  %s814 = sphi %s804, %s823
                  %s815 = sphi %s806, %s824
                $region84: #{shifted_patch_tokenization.1} parent=73 // loop_header_branch
                  %812 = sbr.rel (%p809) target = $region88
                $region85: #{shifted_patch_tokenization.1} parent=73 // loop_body
                  %v816 = vld [vmem:[%s814] sm:$0xff]
                  %817 = vst [vmem:[%s815] sm:$0xff] %v816
                  %s818 = sadd.s32 1, %s813
                  %p819 = scmp.ge.s32.totalorder %s818, %s801
                  %s820 = scalar_select %p819, 0, %s818
                  %s821 = smul.u32 %s820, 8
                  %s822 = smul.u32 %s820, 8
                  %s823 = scalar_lea.vmem %s804, %s821 [#allocation2]
                  %s824 = scalar_lea.vmem %s806, %s822
                $region86: #{shifted_patch_tokenization.1} parent=73 // loop_footer
                  %s810 = sadd.s32 %s808, 1
                $region87: #{shifted_patch_tokenization.1} parent=73 // loop_footer_branch
                  %807 = sbr.rel target = $region83
                $region88: #{shifted_patch_tokenization.1} parent=73 // loop_exit
                  _
              $region74: #{shifted_patch_tokenization.1} parent=51 // pred_fallthru
                _
              // Predicated region
              $region89: #{shifted_patch_tokenization.1} parent=51 // pred_check
                _
              $region90: #{shifted_patch_tokenization.1} parent=51 // pred_check_branch
                %826 = sbr.rel target = $region92
              $region91: #{shifted_patch_tokenization.1} parent=51 // pred_region
                _
              $region92: #{shifted_patch_tokenization.1} parent=51 // pred_fallthru
                _
            $region52: #{shifted_patch_tokenization.1} parent=47 // pred_fallthru
              _
            // Predicated region
            $region53: #{shifted_patch_tokenization.1} parent=47 // pred_check
              _
            $region54: #{shifted_patch_tokenization.1} parent=47 // pred_check_branch
              %721 = sbr.rel target = $region56
            $region55: #{shifted_patch_tokenization.1} parent=47 // pred_region
              %s723 = sshrl.u32 %s710, 2
              // While loop
              $region57: #{shifted_patch_tokenization.1} parent=55 // loop_pre_header
                _
              $region58: #{shifted_patch_tokenization.1} parent=55 // loop_header
                %s725 = sphi 0, %s727
                %p726 = scmp.ge.s32.totalorder %s725, %s723
                %s730 = sphi 0, %s743
                %s731 = sphi %s703, %s746
                %s732 = sphi %s714, %s747
              $region59: #{shifted_patch_tokenization.1} parent=55 // loop_header_branch
                %729 = sbr.rel (%p726) target = $region63
              $region60: #{shifted_patch_tokenization.1} parent=55 // loop_body
                %v733 = vld [vmem:[%s731] sm:$0xff]
                %734 = vst [vmem:[%s732] sm:$0xff] %v733
                %v735 = vld [vmem:[%s731 + $0x8] sm:$0xff]
                %736 = vst [vmem:[%s732 + $0x8] sm:$0xff] %v735
                %v737 = vld [vmem:[%s731 + $0x10] sm:$0xff]
                %738 = vst [vmem:[%s732 + $0x10] sm:$0xff] %v737
                %v739 = vld [vmem:[%s731 + $0x18] sm:$0xff]
                %740 = vst [vmem:[%s732 + $0x18] sm:$0xff] %v739
                %s741 = sadd.s32 1, %s730
                %p742 = scmp.ge.s32.totalorder %s741, %s723
                %s743 = scalar_select %p742, 0, %s741
                %s744 = smul.u32 %s743, 32
                %s745 = smul.u32 %s743, 32
                %s746 = scalar_lea.vmem %s703, %s744 [#allocation2]
                %s747 = scalar_lea.vmem %s714, %s745
              $region61: #{shifted_patch_tokenization.1} parent=55 // loop_footer
                %s727 = sadd.s32 %s725, 1
              $region62: #{shifted_patch_tokenization.1} parent=55 // loop_footer_branch
                %724 = sbr.rel target = $region58
              $region63: #{shifted_patch_tokenization.1} parent=55 // loop_exit
                _
              %s748 = sshrl.u32 %s710, 2
              %s749 = sand.u32 %s710, 3
              %s750 = smul.u32 %s748, 4
              %s751 = smul.u32 8, %s750
              %s752 = scalar_lea.vmem %s703, %s751 [#allocation2]
              %s753 = smul.u32 8, %s750
              %s754 = scalar_lea.vmem %s714, %s753
              // While loop
              $region64: #{shifted_patch_tokenization.1} parent=55 // loop_pre_header
                _
              $region65: #{shifted_patch_tokenization.1} parent=55 // loop_header
                %s756 = sphi 0, %s758
                %p757 = scmp.ge.s32.totalorder %s756, %s749
                %s761 = sphi 0, %s768
                %s762 = sphi %s752, %s771
                %s763 = sphi %s754, %s772
              $region66: #{shifted_patch_tokenization.1} parent=55 // loop_header_branch
                %760 = sbr.rel (%p757) target = $region70
              $region67: #{shifted_patch_tokenization.1} parent=55 // loop_body
                %v764 = vld [vmem:[%s762] sm:$0xff]
                %765 = vst [vmem:[%s763] sm:$0xff] %v764
                %s766 = sadd.s32 1, %s761
                %p767 = scmp.ge.s32.totalorder %s766, %s749
                %s768 = scalar_select %p767, 0, %s766
                %s769 = smul.u32 %s768, 8
                %s770 = smul.u32 %s768, 8
                %s771 = scalar_lea.vmem %s752, %s769 [#allocation2]
                %s772 = scalar_lea.vmem %s754, %s770
              $region68: #{shifted_patch_tokenization.1} parent=55 // loop_footer
                %s758 = sadd.s32 %s756, 1
              $region69: #{shifted_patch_tokenization.1} parent=55 // loop_footer_branch
                %755 = sbr.rel target = $region65
              $region70: #{shifted_patch_tokenization.1} parent=55 // loop_exit
                _
            $region56: #{shifted_patch_tokenization.1} parent=47 // pred_fallthru
              _
          $region48: #{shifted_patch_tokenization.1} parent=43 // pred_fallthru
            _
          %827 = vnop
        $region44: #{shifted_patch_tokenization.1} parent=39 // pred_fallthru
          _
      $region40: #{shifted_patch_tokenization.1} parent=5 // pred_fallthru
        _
      %p828 = scmp.le.s32.totalorder 2, %s11
      // Predicated region
      $region93: #{shifted_patch_tokenization.1} parent=5 // pred_check
        %p829 = pneg %p828
      $region94: #{shifted_patch_tokenization.1} parent=5 // pred_check_branch
        %831 = sbr.rel (%p829) target = $region96
      $region95: #{shifted_patch_tokenization.1} parent=5 // pred_region
        %s832 = ssub.s32 %s11, 2
        // Predicated region
        $region97: #{shifted_patch_tokenization.1} parent=95 // pred_check
          %p833 = pneg %p150
        $region98: #{shifted_patch_tokenization.1} parent=95 // pred_check_branch
          %835 = sbr.rel (%p833) target = $region100
        $region99: #{shifted_patch_tokenization.1} parent=95 // pred_region
          %s836 = sand.u32 %s135, 1
          %s837 = sand.u32 %s135, 1
          %s838 = smul.addr %s837, 32
          %s839 = scalar_lea.vmem [#allocation2], %s838
        $region100: #{shifted_patch_tokenization.1} parent=95 // pred_fallthru
          _
      $region96: #{shifted_patch_tokenization.1} parent=5 // pred_fallthru
        _
    $region6: #{shifted_patch_tokenization.1} parent=1 // loop_footer
      %s15 = sadd.s32 1, %s11
    $region7: #{shifted_patch_tokenization.1} parent=1 // loop_footer_branch
      %10 = sbr.rel target = $region3
    $region8: #{shifted_patch_tokenization.1} parent=1 // loop_exit
      _

</llo_original>
